<compile_context>
chip_gen: v6e
topology: v6e:2x2x1
jax: 0.10.0
libtpu: 0.0.40
codegen_flags: <defaults>
</compile_context>

<pallas_src>
import functools

import numpy as np
import jax
import jax.numpy as jnp
from jax.experimental import pallas as pl
from jax.experimental.pallas import tpu as pltpu


# ----------------------------------------------------------------------------- kernel
def _dino_kernel(scalars_ref, center_ref, student_ref, teacher_ref,
                 ploss_ref, pcenter_ref,
                 texp_ref, tsum_ref, lpsum_ref, dot_ref):
    """Grid = (row_tile, crop).  Per row tile: teacher exp/denominator once at crop 0,
    streamed student log-softmax per crop, per-row dot accumulation, finalize at the
    last crop (exact per-row reciprocal, tiny reduce)."""
    v = pl.program_id(1)                       # crop index (innermost, "arbitrary")
    last = pl.num_programs(1) - 1
    inv_temp = scalars_ref[0]                  # 1 / teacher_temp
    inv_student_temp = scalars_ref[1]          # 1 / student_temp

    # ---- student log-softmax for this crop (every step) ----
    s = student_ref[0].astype(jnp.float32) * inv_student_temp          # (TB, D)
    s_max = jnp.max(s, axis=-1, keepdims=True)
    s_shift = s - s_max
    lse = jnp.log(jnp.sum(jnp.exp(s_shift), axis=-1, keepdims=True))
    lp = s_shift - lse                                                 # (TB, D)

    # ---- crop 0: teacher exp / denominators / center row-sum + lp_sum init ----
    @pl.when(v == 0)
    def _init():
        teacher = teacher_ref[...].astype(jnp.float32)                 # (2, TB, D)
        # per-tile teacher row-sum (center EMA finalized in the wrapper)
        pcenter_ref[...] = jnp.sum(teacher[0] + teacher[1],
                                   axis=0, keepdims=True)[None]        # (1, 1, D)
        center = center_ref[...].astype(jnp.float32)                   # (1, D)
        t_logits = (teacher - center) * inv_temp                       # (2, TB, D)
        t_max = jnp.max(t_logits, axis=-1, keepdims=True)
        t_exp = jnp.exp(t_logits - t_max)
        texp_ref[...] = t_exp                                          # unnormalized softmax
        tsum_ref[...] = jnp.sum(t_exp, axis=-1, keepdims=True)         # (2, TB, 1)
        lpsum_ref[...] = lp

    @pl.when(v > 0)
    def _accum():
        lpsum_ref[...] += lp

    # ---- <q_iq, lp_iq> dots (unnormalized), taken immediately, never stored ----
    @pl.when(v == 0)
    def _dot0():
        dot_ref[0] = jnp.sum(texp_ref[0] * lp, axis=-1, keepdims=True)  # (TB, 1)

    @pl.when(v == 1)
    def _dot1():
        dot_ref[1] = jnp.sum(texp_ref[1] * lp, axis=-1, keepdims=True)

    # ---- finalize: cross terms against lp_sum, exact per-row normalization ----
    #   sum_{iq} sum_{v!=iq} sum_d -q_iq*lp_v == sum_{iq} sum_d q_iq*(lp_iq - lp_sum)
    @pl.when(v == last)
    def _finalize():
        lp_sum = lpsum_ref[...]                                        # (TB, D)
        cross0 = jnp.sum(texp_ref[0] * lp_sum, axis=-1, keepdims=True)
        cross1 = jnp.sum(texp_ref[1] * lp_sum, axis=-1, keepdims=True)
        t_sum = tsum_ref[...]                                          # (2, TB, 1)
        per_row = ((dot_ref[0] - cross0) / t_sum[0] +
                   (dot_ref[1] - cross1) / t_sum[1])                   # (TB, 1), exact recip
        ploss_ref[...] = jnp.full((1, 1, 128), jnp.sum(per_row), dtype=jnp.float32)


# ----------------------------------------------------------------------------- tiling
def _sublane_multiple(itemsize):
    # f32 -> 8, bf16/f16 -> 16, int8/fp8 -> 32 sublanes per packed vreg
    return {4: 8, 2: 16, 1: 32}.get(int(itemsize), 8)


def _vmem_config():
    """Generation-aware VMEM budgets: use a large fraction of VMEM on the 128 MiB
    parts (v5e/v6e), stay conservative on v7x (64 MiB per TensorCore)."""
    cap = None
    try:
        info = pltpu.get_tpu_info()
        cap = getattr(info, "vmem_capacity_bytes", None)
    except Exception:
        cap = None
    if not cap:
        cap = 64 * 1024 * 1024
    vmem_limit = min((cap * 3) // 4, 96 * 1024 * 1024)
    budget = (vmem_limit * 3) // 4
    return int(budget), int(vmem_limit)


def _choose_row_tile(B, D, in_itemsize, budget_bytes):
    """Largest row tile (dtype-aware sublane multiple dividing B, or B itself) whose
    streamed inputs + resident scratch + f32 intermediates fit the VMEM budget.
    Prefers >= 2 row tiles (pipelining depth / v7x megacore)."""
    sub = _sublane_multiple(in_itemsize)
    cands = [c for c in range(B, 0, -1) if B % c == 0 and c % sub == 0]
    if not cands:
        cands = [B]        # tiny batch: full-extent block is still a legal BlockSpec
    ordered = [c for c in cands if c < B] + [c for c in cands if c == B]

    def working_set(tb):
        streams = 3 * tb * D * in_itemsize * 2    # student + 2 teacher chunks, double-buffered
        scratch = 3 * tb * D * 4                  # teacher exp (2x) + running lp_sum
        interm = 6 * tb * D * 4                   # f32 logits / shifted / exp temporaries
        return streams + scratch + interm

    for c in ordered:
        if working_set(c) <= budget_bytes:
            return c
    # TODO(synk): add class-dimension (D) tiling with an online softmax for this case.
    raise ValueError(
        f"DINOLoss Pallas kernel: no row tile fits the VMEM budget ({budget_bytes} B) "
        f"for out_dim={D}; class-dimension tiling would be required.")


# ----------------------------------------------------------------------------- wrapper
def _dino_loss_forward(student, teacher, center, temp, *,
                       ncrops, student_temp, center_momentum, row_tile=None):
    n_rows, D = student.shape
    B = n_rows // ncrops

    student3 = student.reshape(ncrops, B, D)   # free HBM reshape
    teacher3 = teacher.reshape(2, B, D)

    in_itemsize = max(jnp.dtype(student.dtype).itemsize,
                      jnp.dtype(teacher.dtype).itemsize)
    budget, vmem_limit = _vmem_config()
    sub = _sublane_multiple(in_itemsize)
    if row_tile is None:
        tb = _choose_row_tile(B, D, in_itemsize, budget)
    else:
        tb = int(row_tile)
        assert B % tb == 0 and (tb % sub == 0 or tb == B), "invalid row_tile"
    nt = B // tb

    inv_temp = (1.0 / temp).astype(jnp.float32)
    scalars = jnp.stack([inv_temp, jnp.float32(1.0 / student_temp)])   # (2,) f32 -> SMEM

    partial_loss, partial_center = pl.pallas_call(
        _dino_kernel,
        grid=(nt, ncrops),
        in_specs=[
            pl.BlockSpec(memory_space=pltpu.MemorySpace.SMEM),          # scalars (2,)
            pl.BlockSpec((1, D), lambda t, v: (0, 0)),                  # center (resident)
            pl.BlockSpec((1, tb, D), lambda t, v: (v, t, 0)),           # one student crop/step
            pl.BlockSpec((2, tb, D), lambda t, v: (0, t, 0)),           # teacher (resident over v)
        ],
        out_specs=[
            pl.BlockSpec((1, 1, 128), lambda t, v: (t, 0, 0)),          # per-tile CE partial
            pl.BlockSpec((1, 1, D), lambda t, v: (t, 0, 0)),            # per-tile teacher row-sum
        ],
        out_shape=[
            jax.ShapeDtypeStruct((nt, 1, 128), jnp.float32),
            jax.ShapeDtypeStruct((nt, 1, D), jnp.float32),
        ],
        scratch_shapes=[
            pltpu.VMEM((2, tb, D), jnp.float32),   # teacher exp (unnormalized softmax)
            pltpu.VMEM((2, tb, 1), jnp.float32),   # teacher softmax denominators
            pltpu.VMEM((tb, D), jnp.float32),      # running sum of student log-probs
            pltpu.VMEM((2, tb, 1), jnp.float32),   # per-row <q_iq, lp_iq> dots
        ],
        compiler_params=pltpu.CompilerParams(
            dimension_semantics=("parallel", "arbitrary"),   # tiles sharded, crops accumulate
            vmem_limit_bytes=vmem_limit,
        ),
    )(scalars, center, student3, teacher3)

    n_terms = 2 * (ncrops - 1)
    loss = jnp.sum(partial_loss[:, 0, 0]) / jnp.float32(B * n_terms)

    batch_center = jnp.sum(partial_center, axis=0) / jnp.float32(2 * B)   # (1, D)
    # TODO(synk): dist.all_reduce over data-parallel replicas not modeled (world_size = 1).
    new_center = (center.astype(jnp.float32) * center_momentum
                  + batch_center * (1.0 - center_momentum))
    return loss, new_center


class DINOLossPallas:
    def __init__(self, out_dim, ncrops, warmup_teacher_temp, teacher_temp,
                 warmup_teacher_temp_epochs, nepochs,
                 student_temp=0.1, center_momentum=0.9, row_tile=None):
        self.out_dim = out_dim
        self.ncrops = ncrops
        self.student_temp = float(student_temp)
        self.center_momentum = float(center_momentum)
        self.center = jnp.zeros((1, out_dim), jnp.float32)
        self.teacher_temp_schedule = np.concatenate((
            np.linspace(warmup_teacher_temp, teacher_temp, warmup_teacher_temp_epochs),
            np.ones(nepochs - warmup_teacher_temp_epochs) * teacher_temp,
        ))
        # One jitted forward; teacher temperature is a traced scalar -> no per-epoch retrace.
        self._forward = jax.jit(functools.partial(
            _dino_loss_forward,
            ncrops=self.ncrops,
            student_temp=self.student_temp,
            center_momentum=self.center_momentum,
            row_tile=row_tile,
        ))

    def __call__(self, student_output, teacher_output, epoch):
        n_rows, out_dim = student_output.shape
        assert out_dim == self.out_dim
        assert self.ncrops >= 2 and n_rows % self.ncrops == 0
        batch = n_rows // self.ncrops
        assert teacher_output.shape == (2 * batch, out_dim)

        temp = jnp.float32(self.teacher_temp_schedule[epoch])
        loss, new_center = self._forward(student_output, teacher_output,
                                         self.center, temp)
        self.center = new_center            # buffer update side-effect (as in PyTorch)
        return loss


# ----------------------------------------------------------------------------- reference
def _reference_loss(student_output, teacher_output, center, ncrops,
                    temp, student_temp):
    """Pure-JAX reference for a correctness sanity check."""
    batch = student_output.shape[0] // ncrops
    s = student_output / student_temp
    log_p = jax.nn.log_softmax(s, axis=-1)
    q = jax.nn.softmax((teacher_output - center) / temp, axis=-1)
    total, n = 0.0, 0
    for iq in range(2):
        qc = q[iq * batch:(iq + 1) * batch]
        for v in range(ncrops):
            if v == iq:
                continue
            lp = log_p[v * batch:(v + 1) * batch]
            total = total + jnp.mean(jnp.sum(-qc * lp, axis=-1))
            n += 1
    return total / n


def _run_case(ncrops, batch, out_dim, epoch, row_tile, seed):
    loss_mod = DINOLossPallas(
        out_dim=out_dim, ncrops=ncrops,
        warmup_teacher_temp=0.04, teacher_temp=0.07,
        warmup_teacher_temp_epochs=5, nepochs=10,
        student_temp=0.1, center_momentum=0.9, row_tile=row_tile,
    )
    key = jax.random.PRNGKey(seed)
    k1, k2 = jax.random.split(key)
    student_output = jax.random.normal(k1, (ncrops * batch, out_dim), jnp.float32)
    teacher_output = jax.random.normal(k2, (2 * batch, out_dim), jnp.float32)

    center_before = loss_mod.center
    loss = jax.block_until_ready(loss_mod(student_output, teacher_output, epoch))
    new_center = jax.block_until_ready(loss_mod.center)

    temp = float(loss_mod.teacher_temp_schedule[epoch])
    ref_loss = _reference_loss(student_output, teacher_output, center_before,
                               ncrops, temp, loss_mod.student_temp)
    ref_center = (center_before * loss_mod.center_momentum
                  + (jnp.sum(teacher_output, axis=0, keepdims=True)
                     / teacher_output.shape[0]) * (1 - loss_mod.center_momentum))
    # Exact per-row reciprocal in the kernel -> tight tolerance.
    assert jnp.allclose(loss, ref_loss, rtol=1e-3, atol=1e-4), (loss, ref_loss)
    assert jnp.allclose(new_center, ref_center, rtol=1e-4, atol=1e-6), "center mismatch"


if __name__ == "__main__":
    # Case 1: multi-tile, multi-crop grid (batch=16, forced row_tile=8 -> grid (2, 4)).
    _run_case(ncrops=4, batch=16, out_dim=128, epoch=3, row_tile=8, seed=0)
    # Case 2: automatic tile selection, minimal ncrops, wider out_dim (grid (1, 2)).
    _run_case(ncrops=2, batch=8, out_dim=256, epoch=7, row_tile=None, seed=0)
    # Case 3: automatic multi-tile selection (batch=32 -> prefers >= 2 row tiles).
    _run_case(ncrops=6, batch=32, out_dim=128, epoch=9, row_tile=None, seed=0)
    print("KERNEL_OK")
</pallas_src>

<mosaic_0001>
module attributes {stable_mosaic.version = 11 : i64} {
  func.func @_dino_kernel(%arg0: i32, %arg1: i32, %arg2: memref<2xf32, #tpu.memory_space<smem>>, %arg3: memref<1x128xf32, #tpu.memory_space<vmem>>, %arg4: memref<1x8x128xf32, #tpu.memory_space<vmem>>, %arg5: memref<2x8x128xf32, #tpu.memory_space<vmem>>, %arg6: memref<1x1x128xf32, #tpu.memory_space<vmem>>, %arg7: memref<1x1x128xf32, #tpu.memory_space<vmem>>, %arg8: memref<2x8x128xf32, #tpu.memory_space<vmem>>, %arg9: memref<2x8x1xf32, #tpu.memory_space<vmem>>, %arg10: memref<8x128xf32, #tpu.memory_space<vmem>>, %arg11: memref<2x8x1xf32, #tpu.memory_space<vmem>>) attributes {dimension_semantics = [#tpu.dimension_semantics<parallel>, #tpu.dimension_semantics<arbitrary>], iteration_bounds = array<i64: 2, 4>, scalar_prefetch = 0 : i64, scratch_operands = 4 : i64, tpu.core_type = #tpu.core_type<tc>, window_params = [{transform_indices = @transform_0, window_bounds = array<i64: 2>}, {pipeline_mode = #tpu.pipeline_mode<synchronous>, transform_indices = @transform_1, window_bounds = array<i64: 1, 128>}, {transform_indices = @transform_2, window_bounds = array<i64: 1, 8, 128>}, {transform_indices = @transform_3, window_bounds = array<i64: 2, 8, 128>}, {transform_indices = @transform_4, window_bounds = array<i64: 1, 1, 128>}, {transform_indices = @transform_5, window_bounds = array<i64: 1, 1, 128>}]} {
    %c0 = arith.constant 0 : index
    %0 = memref.load %arg2[%c0] : memref<2xf32, #tpu.memory_space<smem>>
    %c1 = arith.constant 1 : index
    %1 = memref.load %arg2[%c1] : memref<2xf32, #tpu.memory_space<smem>>
    %c0_0 = arith.constant 0 : index
    %c0_1 = arith.constant 0 : index
    %c0_2 = arith.constant 0 : index
    %2 = vector.load %arg4[%c0_0, %c0_1, %c0_2] : memref<1x8x128xf32, #tpu.memory_space<vmem>>, vector<1x8x128xf32>
    %3 = vector.shape_cast %2 : vector<1x8x128xf32> to vector<8x128xf32>
    %4 = vector.broadcast %1 : f32 to vector<8x128xf32>
    %5 = arith.mulf %3, %4 : vector<8x128xf32>
    %cst = arith.constant dense<0xFF800000> : vector<8xf32>
    %6 = vector.multi_reduction <maximumf>, %5, %cst [1] : vector<8x128xf32> to vector<8xf32>
    %7 = vector.shape_cast %6 : vector<8xf32> to vector<8x1xf32>
    %8 = vector.broadcast %7 : vector<8x1xf32> to vector<8x128xf32>
    %9 = arith.subf %5, %8 : vector<8x128xf32>
    %10 = math.exp %9 : vector<8x128xf32>
    %cst_3 = arith.constant dense<0.000000e+00> : vector<8xf32>
    %11 = vector.multi_reduction <add>, %10, %cst_3 [1] : vector<8x128xf32> to vector<8xf32>
    %12 = vector.shape_cast %11 : vector<8xf32> to vector<8x1xf32>
    %13 = math.log %12 : vector<8x1xf32>
    %14 = vector.broadcast %13 : vector<8x1xf32> to vector<8x128xf32>
    %15 = arith.subf %9, %14 : vector<8x128xf32>
    %c0_i32 = arith.constant 0 : i32
    %16 = arith.cmpi eq, %arg1, %c0_i32 : i32
    %17 = arith.extui %16 : i1 to i32
    %c0_i32_4 = arith.constant 0 : i32
    %18 = arith.cmpi ne, %17, %c0_i32_4 : i32
    scf.if %18 {
      %c0_11 = arith.constant 0 : index
      %c0_12 = arith.constant 0 : index
      %c0_13 = arith.constant 0 : index
      %31 = vector.load %arg5[%c0_11, %c0_12, %c0_13] : memref<2x8x128xf32, #tpu.memory_space<vmem>>, vector<2x8x128xf32>
      %32 = vector.extract_strided_slice %31 {offsets = [0, 0, 0], sizes = [1, 8, 128], strides = [1, 1, 1]} : vector<2x8x128xf32> to vector<1x8x128xf32>
      %33 = vector.shape_cast %32 : vector<1x8x128xf32> to vector<8x128xf32>
      %34 = vector.extract_strided_slice %31 {offsets = [1, 0, 0], sizes = [1, 8, 128], strides = [1, 1, 1]} : vector<2x8x128xf32> to vector<1x8x128xf32>
      %35 = vector.shape_cast %34 : vector<1x8x128xf32> to vector<8x128xf32>
      %36 = arith.addf %33, %35 : vector<8x128xf32>
      %cst_14 = arith.constant dense<0.000000e+00> : vector<128xf32>
      %37 = vector.multi_reduction <add>, %36, %cst_14 [0] : vector<8x128xf32> to vector<128xf32>
      %38 = vector.shape_cast %37 : vector<128xf32> to vector<1x128xf32>
      %39 = vector.shape_cast %38 : vector<1x128xf32> to vector<1x1x128xf32>
      %c0_15 = arith.constant 0 : index
      %c0_16 = arith.constant 0 : index
      %c0_17 = arith.constant 0 : index
      %40 = vector.load %arg7[%c0_15, %c0_16, %c0_17] : memref<1x1x128xf32, #tpu.memory_space<vmem>>, vector<1x1x128xf32>
      tpu.vector_store %arg7[%c0_15, %c0_16, %c0_17], %39 {strides = array<i32>} : memref<1x1x128xf32, #tpu.memory_space<vmem>>, vector<1x1x128xf32>,
      %c0_18 = arith.constant 0 : index
      %c0_19 = arith.constant 0 : index
      %41 = vector.load %arg3[%c0_18, %c0_19] : memref<1x128xf32, #tpu.memory_space<vmem>>, vector<1x128xf32>
      %42 = vector.shape_cast %41 : vector<1x128xf32> to vector<1x1x128xf32>
      %43 = vector.broadcast %42 : vector<1x1x128xf32> to vector<2x8x128xf32>
      %44 = arith.subf %31, %43 : vector<2x8x128xf32>
      %45 = vector.broadcast %0 : f32 to vector<2x8x128xf32>
      %46 = arith.mulf %44, %45 : vector<2x8x128xf32>
      %cst_20 = arith.constant dense<0xFF800000> : vector<2x8xf32>
      %47 = vector.multi_reduction <maximumf>, %46, %cst_20 [2] : vector<2x8x128xf32> to vector<2x8xf32>
      %48 = vector.shape_cast %47 : vector<2x8xf32> to vector<2x8x1xf32>
      %49 = vector.broadcast %48 : vector<2x8x1xf32> to vector<2x8x128xf32>
      %50 = arith.subf %46, %49 : vector<2x8x128xf32>
      %51 = math.exp %50 : vector<2x8x128xf32>
      %c0_21 = arith.constant 0 : index
      %c0_22 = arith.constant 0 : index
      %c0_23 = arith.constant 0 : index
      %52 = vector.load %arg8[%c0_21, %c0_22, %c0_23] : memref<2x8x128xf32, #tpu.memory_space<vmem>>, vector<2x8x128xf32>
      tpu.vector_store %arg8[%c0_21, %c0_22, %c0_23], %51 {strides = array<i32>} : memref<2x8x128xf32, #tpu.memory_space<vmem>>, vector<2x8x128xf32>,
      %cst_24 = arith.constant dense<0.000000e+00> : vector<2x8xf32>
      %53 = vector.multi_reduction <add>, %51, %cst_24 [2] : vector<2x8x128xf32> to vector<2x8xf32>
      %54 = vector.shape_cast %53 : vector<2x8xf32> to vector<2x8x1xf32>
      %c0_25 = arith.constant 0 : index
      %c0_26 = arith.constant 0 : index
      %c0_27 = arith.constant 0 : index
      %55 = vector.load %arg9[%c0_25, %c0_26, %c0_27] : memref<2x8x1xf32, #tpu.memory_space<vmem>>, vector<2x8x1xf32>
      tpu.vector_store %arg9[%c0_25, %c0_26, %c0_27], %54 {strides = array<i32>} : memref<2x8x1xf32, #tpu.memory_space<vmem>>, vector<2x8x1xf32>,
      %c0_28 = arith.constant 0 : index
      %c0_29 = arith.constant 0 : index
      %56 = vector.load %arg10[%c0_28, %c0_29] : memref<8x128xf32, #tpu.memory_space<vmem>>, vector<8x128xf32>
      tpu.vector_store %arg10[%c0_28, %c0_29], %15 {strides = array<i32>} : memref<8x128xf32, #tpu.memory_space<vmem>>, vector<8x128xf32>,
    } else {
    }
    %c0_i32_5 = arith.constant 0 : i32
    %19 = arith.cmpi sgt, %arg1, %c0_i32_5 : i32
    %20 = arith.extui %19 : i1 to i32
    %c0_i32_6 = arith.constant 0 : i32
    %21 = arith.cmpi ne, %20, %c0_i32_6 : i32
    scf.if %21 {
      %c0_11 = arith.constant 0 : index
      %c0_12 = arith.constant 0 : index
      %31 = vector.load %arg10[%c0_11, %c0_12] : memref<8x128xf32, #tpu.memory_space<vmem>>, vector<8x128xf32>
      %32 = arith.addf %31, %15 : vector<8x128xf32>
      %c0_13 = arith.constant 0 : index
      %c0_14 = arith.constant 0 : index
      %33 = vector.load %arg10[%c0_13, %c0_14] : memref<8x128xf32, #tpu.memory_space<vmem>>, vector<8x128xf32>
      tpu.vector_store %arg10[%c0_13, %c0_14], %32 {strides = array<i32>} : memref<8x128xf32, #tpu.memory_space<vmem>>, vector<8x128xf32>,
    } else {
    }
    %c0_i32_7 = arith.constant 0 : i32
    %22 = arith.cmpi eq, %arg1, %c0_i32_7 : i32
    %23 = arith.extui %22 : i1 to i32
    %c0_i32_8 = arith.constant 0 : i32
    %24 = arith.cmpi ne, %23, %c0_i32_8 : i32
    scf.if %24 {
      %c0_11 = arith.constant 0 : index
      %c0_12 = arith.constant 0 : index
      %c0_13 = arith.constant 0 : index
      %31 = vector.load %arg8[%c0_11, %c0_12, %c0_13] : memref<2x8x128xf32, #tpu.memory_space<vmem>>, vector<1x8x128xf32>
      %32 = vector.shape_cast %31 : vector<1x8x128xf32> to vector<8x128xf32>
      %33 = arith.mulf %32, %15 : vector<8x128xf32>
      %cst_14 = arith.constant dense<0.000000e+00> : vector<8xf32>
      %34 = vector.multi_reduction <add>, %33, %cst_14 [1] : vector<8x128xf32> to vector<8xf32>
      %35 = vector.shape_cast %34 : vector<8xf32> to vector<8x1xf32>
      %c0_15 = arith.constant 0 : index
      %c0_16 = arith.constant 0 : index
      %c0_17 = arith.constant 0 : index
      %36 = vector.load %arg11[%c0_15, %c0_16, %c0_17] : memref<2x8x1xf32, #tpu.memory_space<vmem>>, vector<1x8x1xf32>
      %37 = vector.shape_cast %36 : vector<1x8x1xf32> to vector<8x1xf32>
      %38 = vector.shape_cast %35 : vector<8x1xf32> to vector<1x8x1xf32>
      tpu.vector_store %arg11[%c0_15, %c0_16, %c0_17], %38 {strides = array<i32>} : memref<2x8x1xf32, #tpu.memory_space<vmem>>, vector<1x8x1xf32>,
    } else {
    }
    %c1_i32 = arith.constant 1 : i32
    %25 = arith.cmpi eq, %arg1, %c1_i32 : i32
    %26 = arith.extui %25 : i1 to i32
    %c0_i32_9 = arith.constant 0 : i32
    %27 = arith.cmpi ne, %26, %c0_i32_9 : i32
    scf.if %27 {
      %c1_11 = arith.constant 1 : index
      %c0_12 = arith.constant 0 : index
      %c0_13 = arith.constant 0 : index
      %31 = vector.load %arg8[%c1_11, %c0_12, %c0_13] : memref<2x8x128xf32, #tpu.memory_space<vmem>>, vector<1x8x128xf32>
      %32 = vector.shape_cast %31 : vector<1x8x128xf32> to vector<8x128xf32>
      %33 = arith.mulf %32, %15 : vector<8x128xf32>
      %cst_14 = arith.constant dense<0.000000e+00> : vector<8xf32>
      %34 = vector.multi_reduction <add>, %33, %cst_14 [1] : vector<8x128xf32> to vector<8xf32>
      %35 = vector.shape_cast %34 : vector<8xf32> to vector<8x1xf32>
      %c1_15 = arith.constant 1 : index
      %c0_16 = arith.constant 0 : index
      %c0_17 = arith.constant 0 : index
      %36 = vector.load %arg11[%c1_15, %c0_16, %c0_17] : memref<2x8x1xf32, #tpu.memory_space<vmem>>, vector<1x8x1xf32>
      %37 = vector.shape_cast %36 : vector<1x8x1xf32> to vector<8x1xf32>
      %38 = vector.shape_cast %35 : vector<8x1xf32> to vector<1x8x1xf32>
      tpu.vector_store %arg11[%c1_15, %c0_16, %c0_17], %38 {strides = array<i32>} : memref<2x8x1xf32, #tpu.memory_space<vmem>>, vector<1x8x1xf32>,
    } else {
    }
    %c3_i32 = arith.constant 3 : i32
    %28 = arith.cmpi eq, %arg1, %c3_i32 : i32
    %29 = arith.extui %28 : i1 to i32
    %c0_i32_10 = arith.constant 0 : i32
    %30 = arith.cmpi ne, %29, %c0_i32_10 : i32
    scf.if %30 {
      %c0_11 = arith.constant 0 : index
      %c0_12 = arith.constant 0 : index
      %31 = vector.load %arg10[%c0_11, %c0_12] : memref<8x128xf32, #tpu.memory_space<vmem>>, vector<8x128xf32>
      %c0_13 = arith.constant 0 : index
      %c0_14 = arith.constant 0 : index
      %c0_15 = arith.constant 0 : index
      %32 = vector.load %arg8[%c0_13, %c0_14, %c0_15] : memref<2x8x128xf32, #tpu.memory_space<vmem>>, vector<1x8x128xf32>
      %33 = vector.shape_cast %32 : vector<1x8x128xf32> to vector<8x128xf32>
      %34 = arith.mulf %33, %31 : vector<8x128xf32>
      %cst_16 = arith.constant dense<0.000000e+00> : vector<8xf32>
      %35 = vector.multi_reduction <add>, %34, %cst_16 [1] : vector<8x128xf32> to vector<8xf32>
      %36 = vector.shape_cast %35 : vector<8xf32> to vector<8x1xf32>
      %c1_17 = arith.constant 1 : index
      %c0_18 = arith.constant 0 : index
      %c0_19 = arith.constant 0 : index
      %37 = vector.load %arg8[%c1_17, %c0_18, %c0_19] : memref<2x8x128xf32, #tpu.memory_space<vmem>>, vector<1x8x128xf32>
      %38 = vector.shape_cast %37 : vector<1x8x128xf32> to vector<8x128xf32>
      %39 = arith.mulf %38, %31 : vector<8x128xf32>
      %cst_20 = arith.constant dense<0.000000e+00> : vector<8xf32>
      %40 = vector.multi_reduction <add>, %39, %cst_20 [1] : vector<8x128xf32> to vector<8xf32>
      %41 = vector.shape_cast %40 : vector<8xf32> to vector<8x1xf32>
      %c0_21 = arith.constant 0 : index
      %c0_22 = arith.constant 0 : index
      %c0_23 = arith.constant 0 : index
      %42 = vector.load %arg9[%c0_21, %c0_22, %c0_23] : memref<2x8x1xf32, #tpu.memory_space<vmem>>, vector<2x8x1xf32>
      %c0_24 = arith.constant 0 : index
      %c0_25 = arith.constant 0 : index
      %c0_26 = arith.constant 0 : index
      %43 = vector.load %arg11[%c0_24, %c0_25, %c0_26] : memref<2x8x1xf32, #tpu.memory_space<vmem>>, vector<1x8x1xf32>
      %44 = vector.shape_cast %43 : vector<1x8x1xf32> to vector<8x1xf32>
      %45 = arith.subf %44, %36 : vector<8x1xf32>
      %46 = vector.extract_strided_slice %42 {offsets = [0, 0, 0], sizes = [1, 8, 1], strides = [1, 1, 1]} : vector<2x8x1xf32> to vector<1x8x1xf32>
      %47 = vector.shape_cast %46 : vector<1x8x1xf32> to vector<8x1xf32>
      %48 = arith.divf %45, %47 : vector<8x1xf32>
      %c1_27 = arith.constant 1 : index
      %c0_28 = arith.constant 0 : index
      %c0_29 = arith.constant 0 : index
      %49 = vector.load %arg11[%c1_27, %c0_28, %c0_29] : memref<2x8x1xf32, #tpu.memory_space<vmem>>, vector<1x8x1xf32>
      %50 = vector.shape_cast %49 : vector<1x8x1xf32> to vector<8x1xf32>
      %51 = arith.subf %50, %41 : vector<8x1xf32>
      %52 = vector.extract_strided_slice %42 {offsets = [1, 0, 0], sizes = [1, 8, 1], strides = [1, 1, 1]} : vector<2x8x1xf32> to vector<1x8x1xf32>
      %53 = vector.shape_cast %52 : vector<1x8x1xf32> to vector<8x1xf32>
      %54 = arith.divf %51, %53 : vector<8x1xf32>
      %55 = arith.addf %48, %54 : vector<8x1xf32>
      %56 = vector.shape_cast %55 : vector<8x1xf32> to vector<1x8x1xf32>
      %cst_30 = arith.constant dense<0.000000e+00> : vector<1xf32>
      %57 = vector.multi_reduction <add>, %56, %cst_30 [1, 2] : vector<1x8x1xf32> to vector<1xf32>
      %58 = vector.shape_cast %57 : vector<1xf32> to vector<1x1x1xf32>
      %59 = vector.extract %58[0, 0, 0] : f32 from vector<1x1x1xf32>
      %60 = vector.broadcast %59 : f32 to vector<1x1x128xf32>
      %c0_31 = arith.constant 0 : index
      %c0_32 = arith.constant 0 : index
      %c0_33 = arith.constant 0 : index
      %61 = vector.load %arg6[%c0_31, %c0_32, %c0_33] : memref<1x1x128xf32, #tpu.memory_space<vmem>>, vector<1x1x128xf32>
      tpu.vector_store %arg6[%c0_31, %c0_32, %c0_33], %60 {strides = array<i32>} : memref<1x1x128xf32, #tpu.memory_space<vmem>>, vector<1x1x128xf32>,
    } else {
    }
    return
  }
  func.func @transform_0(%arg0: i32, %arg1: i32) -> i32 {
    %c0_i32 = arith.constant 0 : i32
    %c0_i32_0 = arith.constant 0 : i32
    return %c0_i32 : i32
  }
  func.func @transform_1(%arg0: i32, %arg1: i32) -> (i32, i32) {
    %c0_i32 = arith.constant 0 : i32
    %c0_i32_0 = arith.constant 0 : i32
    %c0_i32_1 = arith.constant 0 : i32
    return %c0_i32, %c0_i32_0 : i32, i32
  }
  func.func @transform_2(%arg0: i32, %arg1: i32) -> (i32, i32, i32) {
    %c0_i32 = arith.constant 0 : i32
    %c0_i32_0 = arith.constant 0 : i32
    return %arg1, %arg0, %c0_i32 : i32, i32, i32
  }
  func.func @transform_3(%arg0: i32, %arg1: i32) -> (i32, i32, i32) {
    %c0_i32 = arith.constant 0 : i32
    %c0_i32_0 = arith.constant 0 : i32
    %c0_i32_1 = arith.constant 0 : i32
    return %c0_i32, %arg0, %c0_i32_0 : i32, i32, i32
  }
  func.func @transform_4(%arg0: i32, %arg1: i32) -> (i32, i32, i32) {
    %c0_i32 = arith.constant 0 : i32
    %c0_i32_0 = arith.constant 0 : i32
    %c0_i32_1 = arith.constant 0 : i32
    return %arg0, %c0_i32, %c0_i32_0 : i32, i32, i32
  }
  func.func @transform_5(%arg0: i32, %arg1: i32) -> (i32, i32, i32) {
    %c0_i32 = arith.constant 0 : i32
    %c0_i32_0 = arith.constant 0 : i32
    %c0_i32_1 = arith.constant 0 : i32
    return %arg0, %c0_i32, %c0_i32_0 : i32, i32, i32
  }
}

</mosaic_0001>

<llo_original>
// kernel: _dino_loss_forward.1
$region0: #{_dino_loss_forward.1}
  #allocation0 [shape = 'u32[]', space=smem, size = 0x4, offset = 0x4, fixed_abs, tag = 'smem constant byte address 0x4 - core index']
  #allocation1 [shape = 'u32[144,128]{1,0:T(1,128)}', space=vmem, size = 0x12000, scoped, tag = 'internal scratch']
  #allocation2 [shape = 'f32[2,8,128]{2,1,0:T(8,128)}', space=vmem, size = 0x2000, scoped, tag = 'scratch operand']
  #allocation3 [shape = 'f32[2,8,1]{2,1,0:T(8,128)}', space=vmem, size = 0x2000, scoped, tag = 'scratch operand']
  #allocation4 [shape = 'f32[8,128]{1,0:T(8,128)}', space=vmem, size = 0x1000, scoped, tag = 'scratch operand']
  #allocation5 [shape = 'f32[2,8,1]{2,1,0:T(8,128)}', space=vmem, size = 0x2000, scoped, tag = 'scratch operand']
  %s0 = inlined_call_operand.vmem [shape: f32[2], index: 0, kind: input, shape index: {}]
  %s1 = inlined_call_operand.vmem [shape: f32[1,128], index: 1, kind: input, shape index: {}]
  %s2 = inlined_call_operand.hbm [shape: f32[4,16,128], index: 2, kind: input, shape index: {}]
  %s3 = inlined_call_operand.hbm [shape: f32[2,16,128], index: 3, kind: input, shape index: {}]
  %s4 = inlined_call_operand.vmem [shape: f32[2,1,128], index: 4, kind: output, shape index: {0}]
  %s5 = inlined_call_operand.vmem [shape: f32[2,1,128], index: 5, kind: output, shape index: {1}]
  %6 = xla_tuple %s4, %s5
  %s7 = sld [smem:[#allocation0]]
  $region89: #{_dino_loss_forward.1} parent=0
    _
  %s9 = ssub.s32 1, %s7
  %s10 = scalar_select 0, %s9, %s7
  $region1: #{_dino_loss_forward.1} parent=0
    #allocation6 [shape = 'u8[512]{0}', space=smem, size = 0x200, scoped, tag = 'input window, operand 0, single buffered']
    #allocation7 [shape = 's32[2]{0}', space=sflag, size = 0x8, scoped, tag = 'scoped memory for _dino_loss_forward.1']
    #allocation8 [shape = 's32[2]{0}', space=sflag, size = 0x8, scoped, tag = 'scoped memory for _dino_loss_forward.1']
    #allocation9 [shape = 'u8[8192]{0}', space=vmem, size = 0x2000, scoped, tag = 'input window, operand 2']
    #allocation10 [shape = 'u8[16384]{0}', space=vmem, size = 0x4000, scoped, tag = 'input window, operand 3']
    #allocation11 [shape = 's32[2]{0}', space=sflag, size = 0x8, scoped, tag = 'scoped memory for _dino_loss_forward.1']
    %11 = vsyncpa [#allocation8], 0
    %12 = vsyncpa [#allocation7], 0
    %s13 = scalar_lea.sflag [#allocation7], 1
    %14 = vsyncpa %s13, 0
    %15 = vsyncpa [#allocation11], 0
    %s16 = scalar_lea.sflag [#allocation11], 1
    %17 = vsyncpa %s16, 0
    loop: start=0, step=1, limit=10
    $region2: #{_dino_loss_forward.1} parent=1 // loop_pre_header
      _
    $region3: #{_dino_loss_forward.1} parent=1 // loop_header
      %s19 = sphi 0, %s23
      %p20 = scmp.ge.s32.totalorder %s19, 10
      %s26 = sphi 0, %s38
      %s27 = sphi 0, %s34
      %s28 = sphi 0, %s26
      %s29 = sphi 0, %s27
      %s30 = sphi 0, %s28
      %s31 = sphi 0, %s29
      %s39 = sphi 0, %s39
      %s41 = sphi 0, %s39
      %s42 = sphi 0, %s41
      %s56 = sphi 0, %s42
      %s60 = sphi 0, %s60
      %s62 = sphi 0, %s60
      %s63 = sphi 0, %s62
      %s77 = sphi 0, %s63
      %s85 = sphi 0, %s87
      %s88 = sphi 0, %s85
      %s89 = sphi 0, %s88
      %s105 = sphi 0, %s89
      %s111 = sphi 0, %s113
      %s114 = sphi 0, %s111
      %s115 = sphi 0, %s114
      %s131 = sphi 0, %s115
      %s137 = sphi 0, %s139
      %s140 = sphi 0, %s137
      %s141 = sphi 0, %s140
      %s157 = sphi 0, %s141
      %s163 = sphi 0, %s165
      %s166 = sphi 0, %s163
      %s167 = sphi 0, %s166
      %s183 = sphi 0, %s167
    $region4: #{_dino_loss_forward.1} parent=1 // loop_header_branch
      %22 = sbr.rel (%p20) target = $region8
    $region5: #{_dino_loss_forward.1} parent=1 // loop_body
      %s24 = ssub.s32 %s19, 1
      %s25 = ssub.s32 %s19, 2
      %s32 = sadd.s32 1, %s27
      %p33 = scmp.ge.s32.totalorder %s32, 4
      %s34 = scalar_select %p33, 0, %s32
      %s35 = sadd.s32 1, %s26
      %s36 = scalar_select %p33, %s35, %s26
      %p37 = scmp.ge.s32.totalorder %s36, 2
      %s38 = scalar_select %p37, 0, %s36
      %s40 = sadd.s32 %s39, 1
      %p43 = scmp.eq.s32.totalorder %s19, 7
      %p44 = scmp.ne.s32.totalorder %s39, %s41
      %p45 = scmp.eq.s32.totalorder %s19, 0
      %p46 = por %p44, %p45
      %p47 = scmp.ne.s32.totalorder %s39, %s41
      %p48 = scmp.eq.s32.totalorder %s24, 7
      %p49 = por %p47, %p48
      %p50 = scmp.ne.s32.totalorder %s41, %s42
      %p51 = scmp.eq.s32.totalorder %s24, 0
      %p52 = por %p50, %p51
      %p53 = scmp.ne.s32.totalorder %s41, %s42
      %p54 = scmp.eq.s32.totalorder %s25, 7
      %p55 = por %p53, %p54
      %p57 = scmp.ne.s32.totalorder %s42, %s56
      %p58 = scmp.eq.s32.totalorder %s25, 0
      %p59 = por %p57, %p58
      %s61 = sadd.s32 %s60, 1
      %p64 = scmp.eq.s32.totalorder %s19, 7
      %p65 = scmp.ne.s32.totalorder %s60, %s62
      %p66 = scmp.eq.s32.totalorder %s19, 0
      %p67 = por %p65, %p66
      %p68 = scmp.ne.s32.totalorder %s60, %s62
      %p69 = scmp.eq.s32.totalorder %s24, 7
      %p70 = por %p68, %p69
      %p71 = scmp.ne.s32.totalorder %s62, %s63
      %p72 = scmp.eq.s32.totalorder %s24, 0
      %p73 = por %p71, %p72
      %p74 = scmp.ne.s32.totalorder %s62, %s63
      %p75 = scmp.eq.s32.totalorder %s25, 7
      %p76 = por %p74, %p75
      %p78 = scmp.ne.s32.totalorder %s63, %s77
      %p79 = scmp.eq.s32.totalorder %s25, 0
      %p80 = por %p78, %p79
      %s81 = ssub.s32 %s27, %s34
      %s82 = ssub.s32 %s26, %s38
      %s83 = sor.u32 %s81, %s82
      %p84 = scmp.eq.s32.totalorder %s83, 0
      %s86 = sadd.s32 %s85, 1
      %s87 = scalar_select %p84, %s85, %s86
      %p90 = pneg %p84
      %p91 = scmp.eq.s32.totalorder %s19, 7
      %p92 = por %p90, %p91
      %p93 = scmp.ne.s32.totalorder %s85, %s88
      %p94 = scmp.eq.s32.totalorder %s19, 0
      %p95 = por %p93, %p94
      %p96 = scmp.ne.s32.totalorder %s85, %s88
      %p97 = scmp.eq.s32.totalorder %s24, 7
      %p98 = por %p96, %p97
      %p99 = scmp.ne.s32.totalorder %s88, %s89
      %p100 = scmp.eq.s32.totalorder %s24, 0
      %p101 = por %p99, %p100
      %p102 = scmp.ne.s32.totalorder %s88, %s89
      %p103 = scmp.eq.s32.totalorder %s25, 7
      %p104 = por %p102, %p103
      %p106 = scmp.ne.s32.totalorder %s89, %s105
      %p107 = scmp.eq.s32.totalorder %s25, 0
      %p108 = por %p106, %p107
      %s109 = ssub.s32 %s26, %s38
      %p110 = scmp.eq.s32.totalorder %s109, 0
      %s112 = sadd.s32 %s111, 1
      %s113 = scalar_select %p110, %s111, %s112
      %p116 = pneg %p110
      %p117 = scmp.eq.s32.totalorder %s19, 7
      %p118 = por %p116, %p117
      %p119 = scmp.ne.s32.totalorder %s111, %s114
      %p120 = scmp.eq.s32.totalorder %s19, 0
      %p121 = por %p119, %p120
      %p122 = scmp.ne.s32.totalorder %s111, %s114
      %p123 = scmp.eq.s32.totalorder %s24, 7
      %p124 = por %p122, %p123
      %p125 = scmp.ne.s32.totalorder %s114, %s115
      %p126 = scmp.eq.s32.totalorder %s24, 0
      %p127 = por %p125, %p126
      %p128 = scmp.ne.s32.totalorder %s114, %s115
      %p129 = scmp.eq.s32.totalorder %s25, 7
      %p130 = por %p128, %p129
      %p132 = scmp.ne.s32.totalorder %s115, %s131
      %p133 = scmp.eq.s32.totalorder %s25, 0
      %p134 = por %p132, %p133
      %s135 = ssub.s32 %s26, %s38
      %p136 = scmp.eq.s32.totalorder %s135, 0
      %s138 = sadd.s32 %s137, 1
      %s139 = scalar_select %p136, %s137, %s138
      %p142 = pneg %p136
      %p143 = scmp.eq.s32.totalorder %s19, 7
      %p144 = por %p142, %p143
      %p145 = scmp.ne.s32.totalorder %s137, %s140
      %p146 = scmp.eq.s32.totalorder %s19, 0
      %p147 = por %p145, %p146
      %p148 = scmp.ne.s32.totalorder %s137, %s140
      %p149 = scmp.eq.s32.totalorder %s24, 7
      %p150 = por %p148, %p149
      %p151 = scmp.ne.s32.totalorder %s140, %s141
      %p152 = scmp.eq.s32.totalorder %s24, 0
      %p153 = por %p151, %p152
      %p154 = scmp.ne.s32.totalorder %s140, %s141
      %p155 = scmp.eq.s32.totalorder %s25, 7
      %p156 = por %p154, %p155
      %p158 = scmp.ne.s32.totalorder %s141, %s157
      %p159 = scmp.eq.s32.totalorder %s25, 0
      %p160 = por %p158, %p159
      %s161 = ssub.s32 %s26, %s38
      %p162 = scmp.eq.s32.totalorder %s161, 0
      %s164 = sadd.s32 %s163, 1
      %s165 = scalar_select %p162, %s163, %s164
      %p168 = pneg %p162
      %p169 = scmp.eq.s32.totalorder %s19, 7
      %p170 = por %p168, %p169
      %p171 = scmp.ne.s32.totalorder %s163, %s166
      %p172 = scmp.eq.s32.totalorder %s19, 0
      %p173 = por %p171, %p172
      %p174 = scmp.ne.s32.totalorder %s163, %s166
      %p175 = scmp.eq.s32.totalorder %s24, 7
      %p176 = por %p174, %p175
      %p177 = scmp.ne.s32.totalorder %s166, %s167
      %p178 = scmp.eq.s32.totalorder %s24, 0
      %p179 = por %p177, %p178
      %p180 = scmp.ne.s32.totalorder %s166, %s167
      %p181 = scmp.eq.s32.totalorder %s25, 7
      %p182 = por %p180, %p181
      %p184 = scmp.ne.s32.totalorder %s167, %s183
      %p185 = scmp.eq.s32.totalorder %s25, 0
      %p186 = por %p184, %p185
      %p187 = scmp.le.s32.totalorder 1, %s19
      %p188 = scmp.lt.s32.totalorder %s19, 9
      %p189 = pnand %p187, %p188
      %p190 = pneg %p189
      // Predicated region
      $region9: #{_dino_loss_forward.1} parent=5 // pred_check
        _
      $region10: #{_dino_loss_forward.1} parent=5 // pred_check_branch
        %192 = sbr.rel (%p189) target = $region12
      $region11: #{_dino_loss_forward.1} parent=5 // pred_region
        %s193 = ssub.s32 %s19, 1
        // Predicated region
        $region13: #{_dino_loss_forward.1} parent=11 // pred_check
          %p194 = pneg %p52
        $region14: #{_dino_loss_forward.1} parent=11 // pred_check_branch
          %196 = sbr.rel (%p194) target = $region16
        $region15: #{_dino_loss_forward.1} parent=11 // pred_region
          %s198 = ssub.s32 16, 16
          %199 = vsyncadd [#allocation8], %s198
          %s201 = sshll.u32 %s0, 4
          %s202 = int_to_ptr.vmem [resolvable:$true] %s201
          %204 = dma.vmem_to_smem %s202, 16, [#allocation6], [#allocation8]
        $region16: #{_dino_loss_forward.1} parent=11 // pred_fallthru
          _
        // Predicated region
        $region17: #{_dino_loss_forward.1} parent=11 // pred_check
          %p205 = pneg %p73
        $region18: #{_dino_loss_forward.1} parent=11 // pred_check_branch
          %207 = sbr.rel (%p205) target = $region20
        $region19: #{_dino_loss_forward.1} parent=11 // pred_region
          _
        $region20: #{_dino_loss_forward.1} parent=11 // pred_fallthru
          _
      $region12: #{_dino_loss_forward.1} parent=5 // pred_fallthru
        _
      %p208 = scmp.lt.s32.totalorder %s19, 8
      // Predicated region
      $region21: #{_dino_loss_forward.1} parent=5 // pred_check
        %p209 = pneg %p208
      $region22: #{_dino_loss_forward.1} parent=5 // pred_check_branch
        %211 = sbr.rel (%p209) target = $region24
      $region23: #{_dino_loss_forward.1} parent=5 // pred_region
        // Predicated region
        $region25: #{_dino_loss_forward.1} parent=23 // pred_check
          %p212 = pneg %p95
        $region26: #{_dino_loss_forward.1} parent=23 // pred_check_branch
          %214 = sbr.rel (%p212) target = $region28
        $region27: #{_dino_loss_forward.1} parent=23 // pred_region
          %s215 = sand.u32 %s85, 1
          %s216 = scalar_lea.sflag [#allocation7], %s215
          %s217 = sand.u32 %s85, 1
          %s218 = smul.addr %s217, 8
          %s219 = scalar_lea.vmem [#allocation9], %s218
          %s221 = ssub.s32 128, 128
          %222 = vsyncadd %s216, %s221
          %s223 = smul.addr %s27, 2
          %s224 = sadd.s32 %s26, %s223
          %s225 = smul.addr %s224, 128
          %s226 = scalar_lea.hbm %s2, %s225
          %s228 = sshll.u32 %s219, 4
          %s229 = int_to_ptr.vmem [resolvable:$true] %s228
          %231 = dma.hbm_to_vmem [thread:$0]  %s226, 128, %s229, %s216
        $region28: #{_dino_loss_forward.1} parent=23 // pred_fallthru
          _
        // Predicated region
        $region29: #{_dino_loss_forward.1} parent=23 // pred_check
          %p232 = pneg %p121
        $region30: #{_dino_loss_forward.1} parent=23 // pred_check_branch
          %234 = sbr.rel (%p232) target = $region32
        $region31: #{_dino_loss_forward.1} parent=23 // pred_region
          %s235 = sand.u32 %s111, 1
          %s236 = scalar_lea.sflag [#allocation11], %s235
          %s237 = sand.u32 %s111, 1
          %s238 = smul.addr %s237, 16
          %s239 = scalar_lea.vmem [#allocation10], %s238
          %s241 = ssub.s32 256, 256
          %242 = vsyncadd %s236, %s241
          %s243 = smul.addr %s26, 128
          %s244 = scalar_lea.hbm %s3, %s243
          %s245 = sshll.u32 %s239, 4
          %s246 = int_to_ptr.vmem [resolvable:$true] %s245
          %251 = dma.hbm_to_vmem [thread:$0]  %s244, 256, %s246, %s236, 256, 128, 8
        $region32: #{_dino_loss_forward.1} parent=23 // pred_fallthru
          _
      $region24: #{_dino_loss_forward.1} parent=5 // pred_fallthru
        _
      %p252 = scmp.le.s32.totalorder 1, %s19
      %p253 = scmp.lt.s32.totalorder %s19, 9
      %p254 = pnand %p252, %p253
      %p255 = pneg %p254
      // Predicated region
      $region33: #{_dino_loss_forward.1} parent=5 // pred_check
        _
      $region34: #{_dino_loss_forward.1} parent=5 // pred_check_branch
        %257 = sbr.rel (%p254) target = $region36
      $region35: #{_dino_loss_forward.1} parent=5 // pred_region
        %s258 = ssub.s32 %s19, 1
        // Predicated region
        $region37: #{_dino_loss_forward.1} parent=35 // pred_check
          %p259 = pneg %p52
        $region38: #{_dino_loss_forward.1} parent=35 // pred_check_branch
          %261 = sbr.rel (%p259) target = $region40
        $region39: #{_dino_loss_forward.1} parent=35 // pred_region
          %262 = dma.done [#allocation8], 16
        $region40: #{_dino_loss_forward.1} parent=35 // pred_fallthru
          _
        %s263 = sand.u32 %s88, 1
        %s264 = scalar_lea.sflag [#allocation7], %s263
        %s265 = sand.u32 %s88, 1
        %s266 = smul.addr %s265, 8
        %s267 = scalar_lea.vmem [#allocation9], %s266
        // Predicated region
        $region41: #{_dino_loss_forward.1} parent=35 // pred_check
          %p268 = pneg %p101
        $region42: #{_dino_loss_forward.1} parent=35 // pred_check_branch
          %270 = sbr.rel (%p268) target = $region44
        $region43: #{_dino_loss_forward.1} parent=35 // pred_region
          %271 = dma.done %s264, 128
        $region44: #{_dino_loss_forward.1} parent=35 // pred_fallthru
          _
        %s272 = sand.u32 %s114, 1
        %s273 = scalar_lea.sflag [#allocation11], %s272
        %s274 = sand.u32 %s114, 1
        %s275 = smul.addr %s274, 16
        %s276 = scalar_lea.vmem [#allocation10], %s275
        // Predicated region
        $region45: #{_dino_loss_forward.1} parent=35 // pred_check
          %p277 = pneg %p127
        $region46: #{_dino_loss_forward.1} parent=35 // pred_check_branch
          %279 = sbr.rel (%p277) target = $region48
        $region47: #{_dino_loss_forward.1} parent=35 // pred_region
          %280 = dma.done %s273, 256
        $region48: #{_dino_loss_forward.1} parent=35 // pred_fallthru
          _
        %281 = sfence
        %p282 = pneg %p52
        %p283 = pneg %p49
        %p284 = pneg %p73
        %p285 = pneg %p70
        %s286 = sand.u32 %s88, 1
        %s287 = scalar_lea.sflag [#allocation7], %s286
        %s288 = sand.u32 %s88, 1
        %s289 = smul.addr %s288, 8
        %s290 = scalar_lea.vmem [#allocation9], %s289
        %p291 = pneg %p101
        %p292 = pneg %p98
        %s293 = sand.u32 %s114, 1
        %s294 = scalar_lea.sflag [#allocation11], %s293
        %s295 = sand.u32 %s114, 1
        %s296 = smul.addr %s295, 16
        %s297 = scalar_lea.vmem [#allocation10], %s296
        %p298 = pneg %p127
        %p299 = pneg %p124
        %p300 = pneg %p153
        %p301 = pneg %p150
        %p302 = scmp.lt.s32.totalorder %s28, 1
        %s303 = scalar_select %p302, %s28, 1
        %s304 = scalar_lea.vmem %s4, %s303
        %p305 = pneg %p179
        %p306 = pneg %p176
        %p307 = scmp.lt.s32.totalorder %s28, 1
        %s308 = scalar_select %p307, %s28, 1
        %s309 = scalar_lea.vmem %s5, %s308
        %p310 = scmp.lt.s32.totalorder %s28, 1
        %s311 = scalar_select %p310, %s28, 1
        %s312 = scalar_lea.vmem %s4, %s311
        %p313 = scmp.lt.s32.totalorder %s28, 1
        %s314 = scalar_select %p313, %s28, 1
        %s315 = scalar_lea.vmem %s5, %s314
        %s316 = sld [smem:[#allocation6]]
        %s317 = sld [smem:[#allocation6 + $0x1]]
        %v318 = vld [vmem:[%s267] sm:$0xff]
        %v319 = vstv %s317
        %v320 = vmul.f32 %v318, %v319
        %321 = vmax.xlane.f32.xlu0 %v320
        %v322 = vpop.xlane.xlu0 %321
        %v323 = vsub.f32 %v320, %v322
        %v324 = vmul.f32 %v323, 1.442695
        %v325 = vpow.pop %v324
        %326 = vadd.xlane.f32.xlu0 %v325
        %v327 = vpop.xlane.xlu0 %326
        %v328 = vlog2.pop %v327
        %v329 = vmul.f32 %v328, 0.6931472
        %v330 = vsub.f32 %v323, %v329
        %p331 = scmp.eq.s32.totalorder %s29, 0
        // Predicated region
        $region49: #{_dino_loss_forward.1} parent=35 // pred_check
          %p332 = pneg %p331
        $region50: #{_dino_loss_forward.1} parent=35 // pred_check_branch
          %334 = sbr.rel (%p332) target = $region52
        $region51: #{_dino_loss_forward.1} parent=35 // pred_region
          %v335 = vld [vmem:[%s276] sm:$0xff]
          %v336 = vld [vmem:[%s276 + $0x8] sm:$0xff]
          %v337 = vadd.f32 %v335, %v336
          %v338 = vrot.slane %v337, 4
          %v339 = vadd.f32 %v337, %v338
          %v340 = vrot.slane %v339, 2
          %v341 = vadd.f32 %v339, %v340
          %v342 = vrot.slane %v341, 1
          %v343 = vadd.f32 %v341, %v342
          %344 = vst [vmem:[%s315] sm:$0x1] %v343
          %v345 = vld [vmem:[%s1] sm:$0x1]
          %v347 = vlaneseq
          %v348 = vshrl.u32 %v347, 7
          %v349 = vsub.s32 0, %v348
          %v350 = vrot.slane %v345, %v349
          %v352 = vsub.f32 %v335, %v350
          %v353 = vsub.f32 %v336, %v350
          %v354 = vstv %s316
          %v355 = vmul.f32 %v352, %v354
          %v356 = vmul.f32 %v353, %v354
          %357 = vmax.xlane.f32.xlu0 %v355
          %v358 = vpop.xlane.xlu0 %357
          %359 = vmax.xlane.f32.xlu0 %v356
          %v360 = vpop.xlane.xlu0 %359
          %v361 = vsub.f32 %v355, %v358
          %v362 = vsub.f32 %v356, %v360
          %v363 = vmul.f32 %v361, 1.442695
          %v364 = vpow.pop %v363
          %v365 = vmul.f32 %v362, 1.442695
          %v366 = vpow.pop %v365
          %367 = vst [vmem:[#allocation2] sm:$0xff] %v364
          %368 = vst [vmem:[#allocation2 + $0x8] sm:$0xff] %v366
          %369 = vadd.xlane.f32.xlu0 %v364
          %v370 = vpop.xlane.xlu0 %369
          %371 = vadd.xlane.f32.xlu0 %v366
          %v372 = vpop.xlane.xlu0 %371
          %vm373 = vcmask 7168
          %374 = vst.msk [vmem:[#allocation3] sm:$0xff] %vm373, %v370
          %375 = vst.msk [vmem:[#allocation3 + $0x8] sm:$0xff] %vm373, %v372
          %376 = vst [vmem:[#allocation4] sm:$0xff] %v330
        $region52: #{_dino_loss_forward.1} parent=35 // pred_fallthru
          _
        %p377 = scmp.gt.s32.totalorder %s29, 0
        // Predicated region
        $region53: #{_dino_loss_forward.1} parent=35 // pred_check
          %p378 = pneg %p377
        $region54: #{_dino_loss_forward.1} parent=35 // pred_check_branch
          %380 = sbr.rel (%p378) target = $region56
        $region55: #{_dino_loss_forward.1} parent=35 // pred_region
          %v381 = vld [vmem:[#allocation4] sm:$0xff]
          %v382 = vadd.f32 %v381, %v330
          %383 = vst [vmem:[#allocation4] sm:$0xff] %v382
        $region56: #{_dino_loss_forward.1} parent=35 // pred_fallthru
          _
        // Predicated region
        $region57: #{_dino_loss_forward.1} parent=35 // pred_check
          %p384 = pneg %p331
        $region58: #{_dino_loss_forward.1} parent=35 // pred_check_branch
          %386 = sbr.rel (%p384) target = $region60
        $region59: #{_dino_loss_forward.1} parent=35 // pred_region
          %v387 = vld [vmem:[#allocation2] sm:$0xff]
          %v388 = vmul.f32 %v387, %v330
          %389 = vadd.xlane.f32.xlu0 %v388
          %v390 = vpop.xlane.xlu0 %389
          %vm391 = vcmask 7168
          %392 = vst.msk [vmem:[#allocation5] sm:$0xff] %vm391, %v390
        $region60: #{_dino_loss_forward.1} parent=35 // pred_fallthru
          _
        %p393 = scmp.eq.s32.totalorder %s29, 1
        // Predicated region
        $region61: #{_dino_loss_forward.1} parent=35 // pred_check
          %p394 = pneg %p393
        $region62: #{_dino_loss_forward.1} parent=35 // pred_check_branch
          %396 = sbr.rel (%p394) target = $region64
        $region63: #{_dino_loss_forward.1} parent=35 // pred_region
          %s397 = scalar_lea.vmem [#allocation2], 8
          %v398 = vld [vmem:[%s397] sm:$0xff]
          %v399 = vmul.f32 %v398, %v330
          %400 = vadd.xlane.f32.xlu0 %v399
          %v401 = vpop.xlane.xlu0 %400
          %s402 = scalar_lea.vmem [#allocation5], 8
          %vm403 = vcmask 7168
          %404 = vst.msk [vmem:[%s402] sm:$0xff] %vm403, %v401
        $region64: #{_dino_loss_forward.1} parent=35 // pred_fallthru
          _
        %p405 = scmp.eq.s32.totalorder %s29, 3
        // Predicated region
        $region65: #{_dino_loss_forward.1} parent=35 // pred_check
          %p406 = pneg %p405
        $region66: #{_dino_loss_forward.1} parent=35 // pred_check_branch
          %408 = sbr.rel (%p406) target = $region68
        $region67: #{_dino_loss_forward.1} parent=35 // pred_region
          %v409 = vld [vmem:[#allocation4] sm:$0xff]
          %v410 = vld [vmem:[#allocation2] sm:$0xff]
          %v411 = vmul.f32 %v410, %v409
          %412 = vadd.xlane.f32.xlu0 %v411
          %v413 = vpop.xlane.xlu0 %412
          %s414 = scalar_lea.vmem [#allocation2], 8
          %v415 = vld [vmem:[%s414] sm:$0xff]
          %v416 = vmul.f32 %v415, %v409
          %417 = vadd.xlane.f32.xlu0 %v416
          %v418 = vpop.xlane.xlu0 %417
          %v419 = vld [vmem:[#allocation3] sm:$0xff]
          %v420 = vld [vmem:[#allocation3 + $0x8] sm:$0xff]
          %v421 = vld [vmem:[#allocation5] sm:$0xff]
          %v422 = vsub.f32 %v421, %v413
          %v423 = vrcp.pop %v419
          %v424 = vmul.f32 %v422, %v423
          %s425 = scalar_lea.vmem [#allocation5], 8
          %v426 = vld [vmem:[%s425] sm:$0xff]
          %v427 = vsub.f32 %v426, %v418
          %v428 = vrcp.pop %v420
          %v429 = vmul.f32 %v427, %v428
          %v430 = vadd.f32 %v424, %v429
          %vm431 = vcmask 7168
          %v432 = vsel %vm431, %v430, 0.0
          %433 = vadd.xlane.f32.xlu0 %v432
          %v434 = vpop.xlane.xlu0 %433
          %v435 = vrot.slane %v434, 4
          %v436 = vadd.f32 %v434, %v435
          %v437 = vrot.slane %v436, 2
          %v438 = vadd.f32 %v436, %v437
          %v439 = vrot.slane %v438, 1
          %v440 = vadd.f32 %v438, %v439
          %s441 = vtos %v440
          %v442 = vstv %s441
          %443 = vst [vmem:[%s312] sm:$0x1] %v442
        $region68: #{_dino_loss_forward.1} parent=35 // pred_fallthru
          _
        %p444 = scmp.lt.s32.totalorder %s28, 1
        %s445 = scalar_select %p444, %s28, 1
        %s446 = scalar_lea.vmem %s4, %s445
        %p447 = scmp.lt.s32.totalorder %s28, 1
        %s448 = scalar_select %p447, %s28, 1
        %s449 = scalar_lea.vmem %s5, %s448
        // Predicated region
        $region69: #{_dino_loss_forward.1} parent=35 // pred_check
          %p450 = pneg %p150
        $region70: #{_dino_loss_forward.1} parent=35 // pred_check_branch
          %452 = sbr.rel (%p450) target = $region72
        $region71: #{_dino_loss_forward.1} parent=35 // pred_region
          _
        $region72: #{_dino_loss_forward.1} parent=35 // pred_fallthru
          _
        // Predicated region
        $region73: #{_dino_loss_forward.1} parent=35 // pred_check
          %p453 = pneg %p176
        $region74: #{_dino_loss_forward.1} parent=35 // pred_check_branch
          %455 = sbr.rel (%p453) target = $region76
        $region75: #{_dino_loss_forward.1} parent=35 // pred_region
          _
        $region76: #{_dino_loss_forward.1} parent=35 // pred_fallthru
          _
      $region36: #{_dino_loss_forward.1} parent=5 // pred_fallthru
        _
      %p456 = scmp.le.s32.totalorder 2, %s19
      // Predicated region
      $region77: #{_dino_loss_forward.1} parent=5 // pred_check
        %p457 = pneg %p456
      $region78: #{_dino_loss_forward.1} parent=5 // pred_check_branch
        %459 = sbr.rel (%p457) target = $region80
      $region79: #{_dino_loss_forward.1} parent=5 // pred_region
        %s460 = ssub.s32 %s19, 2
        // Predicated region
        $region81: #{_dino_loss_forward.1} parent=79 // pred_check
          %p461 = pneg %p156
        $region82: #{_dino_loss_forward.1} parent=79 // pred_check_branch
          %463 = sbr.rel (%p461) target = $region84
        $region83: #{_dino_loss_forward.1} parent=79 // pred_region
          %p464 = scmp.lt.s32.totalorder %s30, 1
          %s465 = scalar_select %p464, %s30, 1
          %s466 = scalar_lea.vmem %s4, %s465
        $region84: #{_dino_loss_forward.1} parent=79 // pred_fallthru
          _
        // Predicated region
        $region85: #{_dino_loss_forward.1} parent=79 // pred_check
          %p467 = pneg %p182
        $region86: #{_dino_loss_forward.1} parent=79 // pred_check_branch
          %469 = sbr.rel (%p467) target = $region88
        $region87: #{_dino_loss_forward.1} parent=79 // pred_region
          %p470 = scmp.lt.s32.totalorder %s30, 1
          %s471 = scalar_select %p470, %s30, 1
          %s472 = scalar_lea.vmem %s5, %s471
        $region88: #{_dino_loss_forward.1} parent=79 // pred_fallthru
          _
      $region80: #{_dino_loss_forward.1} parent=5 // pred_fallthru
        _
    $region6: #{_dino_loss_forward.1} parent=1 // loop_footer
      %s23 = sadd.s32 1, %s19
    $region7: #{_dino_loss_forward.1} parent=1 // loop_footer_branch
      %18 = sbr.rel target = $region3
    $region8: #{_dino_loss_forward.1} parent=1 // loop_exit
      _
    %473 = vsyncpa [#allocation7], 1
    %s474 = scalar_lea.sflag [#allocation7], 1
    %475 = vsyncpa %s474, 1
    %476 = vsyncpa [#allocation11], 1
    %s477 = scalar_lea.sflag [#allocation11], 1
    %478 = vsyncpa %s477, 1
    %479 = vsyncpa [#allocation8], 1
    %s480 = scalar_lea.sflag [#allocation8], 1
    %481 = vsyncpa %s480, 1

</llo_original>
